<compile_context>
chip_gen: v7x
topology: tpu7x:2x2x1
jax: 0.10.0
libtpu: 0.0.40
codegen_flags: <defaults>
</compile_context>

<pallas_src>
import functools

import jax
import jax.numpy as jnp
from jax.experimental import pallas as pl
from jax.experimental.pallas import tpu as pltpu

LANE = 128


def _round_up(n, m):
    return ((n + m - 1) // m) * m


# ----------------------------------------------------------------------------
# Kernel: x @ W1' + b1' -> ReLU -> @ W2' + b2' -> ReLU -> @ W3 + b3
# (Dropout is identity in eval mode; BN already folded into W'/b' offline.)
# ----------------------------------------------------------------------------
def fnn_kernel(x_ref,
               w1_ref, b1_ref,
               w2_ref, b2_ref,
               w3_ref, b3_ref,
               out_ref):
    # Hidden block 1: Linear (+ folded BatchNorm) -> Dropout(eval: id) -> ReLU
    x = x_ref[...].astype(w1_ref.dtype)          # f32 -> bf16 cast in VMEM
    h = jnp.dot(x, w1_ref[...], preferred_element_type=jnp.float32)
    h = jnp.maximum(h + b1_ref[...], 0.0)        # f32 elementwise

    # Hidden block 2
    h = jnp.dot(h.astype(w2_ref.dtype), w2_ref[...],
                preferred_element_type=jnp.float32)
    h = jnp.maximum(h + b2_ref[...], 0.0)

    # Final Linear (bias add in f32, then cast to the output dtype)
    out = jnp.dot(h.astype(w3_ref.dtype), w3_ref[...],
                  preferred_element_type=jnp.float32)
    out_ref[...] = (out + b3_ref[...]).astype(out_ref.dtype)


# ----------------------------------------------------------------------------
# Offline parameter prep: fold eval-mode BN, pad to 128 lanes, cast to bf16.
# Note: W1's K (input-feature) dim is deliberately left UNPADDED so the x HBM
# read in the kernel is not inflated; hidden-layer K dims are padded to match
# the previous layer's padded (zero-filled, hence inert) output columns.
# ----------------------------------------------------------------------------
def fold_and_pad_params(raw, eps=1e-5, weight_dtype=jnp.bfloat16):
    ops = {}
    for li in (1, 2, 3):
        w = raw[f"w{li}"]                      # [in, out] f32 (pre-transposed)
        b = raw[f"b{li}"]                      # [out]     f32
        if li < 3:                             # fold BatchNorm1d (eval mode)
            scale = raw[f"g{li}"] * jax.lax.rsqrt(raw[f"rv{li}"] + eps)
            shift = raw[f"be{li}"] - raw[f"rm{li}"] * scale
            w = w * scale[None, :]
            b = b * scale + shift
        fi, fo = w.shape
        fo_p = _round_up(fo, LANE)
        fi_p = fi if li == 1 else _round_up(fi, LANE)
        w = jnp.pad(w, ((0, fi_p - fi), (0, fo_p - fo)))
        b = jnp.pad(b, (0, fo_p - fo))
        ops[f"w{li}"] = w.astype(weight_dtype)
        ops[f"b{li}"] = b.reshape(1, fo_p).astype(jnp.float32)
    return ops


# ----------------------------------------------------------------------------
# Wrapper: choose batch tiling, launch the fused kernel, slice padding off.
# ----------------------------------------------------------------------------
@functools.partial(jax.jit, static_argnames=("num_classes", "tile_b", "out_dtype"))
def fnn_forward(x, ops, *, num_classes, tile_b=None, out_dtype=jnp.bfloat16):
    B, F = x.shape
    assert ops["w1"].shape[0] == F, "param prep / input feature-dim mismatch"
    Cp = ops["w3"].shape[1]

    # Batch tiling: big tiles amortize the ~0.35us/step overhead and fill the
    # MXU M-dim; for batches >= 256 keep an even grid (>=2) so v7x's two
    # TensorCores both get work (costs one extra, negligible step on v5e/v6e).
    if tile_b is None:
        bp0 = _round_up(B, 16)
        if bp0 <= 128:
            tile_b = bp0                                   # grid = 1
        else:
            tile_b = min(1024, _round_up(pl.cdiv(bp0, 2), 8))
    Bp = _round_up(B, tile_b)

    # No feature padding and no f32->bf16 cast here: the kernel reads the f32
    # x tile directly and casts in VMEM (saves an extra XLA copy / HBM trip).
    xp = x if Bp == B else jnp.pad(x, ((0, Bp - B), (0, 0)))

    operands = (ops["w1"], ops["b1"], ops["w2"], ops["b2"],
                ops["w3"], ops["b3"])

    # VMEM bookkeeping (v7x: 64 MiB physical / 32 MiB scoped default).  When
    # the resident weights get large, single-buffer them (their block index is
    # constant across the grid) and raise the scoped VMEM limit explicitly.
    weight_bytes = sum(int(a.size) * a.dtype.itemsize for a in operands)
    x_tile_bytes = tile_b * F * x.dtype.itemsize
    out_tile_bytes = tile_b * Cp * jnp.dtype(out_dtype).itemsize
    single_buffer_weights = weight_bytes > (8 << 20)
    buf = 1 if single_buffer_weights else 2
    vmem_needed = buf * weight_bytes + 2 * (x_tile_bytes + out_tile_bytes) + (4 << 20)
    vmem_limit = int(vmem_needed) if vmem_needed > (30 << 20) else None
    # TODO(synk): if a single padded layer exceeds ~16 MiB, add a K-tiled
    # "arbitrary" grid axis with an f32 VMEM accumulator instead of keeping all
    # three weights resident.

    def const_spec(arr):
        # Full weight / bias block, same for every batch tile (resident).
        if single_buffer_weights:
            return pl.BlockSpec(arr.shape, lambda i: (0,) * arr.ndim,
                                pipeline_mode=pl.Buffered(1))
        return pl.BlockSpec(arr.shape, lambda i: (0,) * arr.ndim)

    out_p = pl.pallas_call(
        fnn_kernel,
        out_shape=jax.ShapeDtypeStruct((Bp, Cp), out_dtype),
        grid=(Bp // tile_b,),
        in_specs=[pl.BlockSpec((tile_b, F), lambda i: (i, 0))]
                 + [const_spec(a) for a in operands],
        out_specs=pl.BlockSpec((tile_b, Cp), lambda i: (i, 0)),
        compiler_params=pltpu.CompilerParams(
            dimension_semantics=("parallel",),
            vmem_limit_bytes=vmem_limit),
    )(xp, *operands)

    # Slice back to the caller's logical shape (skip if padded logits are OK).
    return out_p[:B, :num_classes]


# ----------------------------------------------------------------------------
# Deterministic synthetic parameters mirroring the PyTorch module shapes.
# ----------------------------------------------------------------------------
def init_params(key, input_size, hidden_layers, num_classes):
    assert len(hidden_layers) == 2   # kernel is specialized to 2 hidden blocks
    dims = [input_size] + list(hidden_layers) + [num_classes]
    raw = {}
    keys = jax.random.split(key, 4 * len(dims))
    ki = 0
    for li in range(len(dims) - 1):
        fan_in, fan_out = dims[li], dims[li + 1]
        bound = 1.0 / float(fan_in) ** 0.5
        raw[f"w{li + 1}"] = jax.random.uniform(
            keys[ki], (fan_in, fan_out), minval=-bound, maxval=bound,
            dtype=jnp.float32); ki += 1                      # already [in, out]
        raw[f"b{li + 1}"] = jax.random.uniform(
            keys[ki], (fan_out,), minval=-bound, maxval=bound,
            dtype=jnp.float32); ki += 1
        if li < len(dims) - 2:
            # BatchNorm1d: gamma/beta + running stats (perturbed so BN matters)
            raw[f"g{li + 1}"] = jnp.ones((fan_out,), jnp.float32)
            raw[f"be{li + 1}"] = jnp.zeros((fan_out,), jnp.float32)
            raw[f"rm{li + 1}"] = 0.1 * jax.random.normal(
                keys[ki], (fan_out,), dtype=jnp.float32); ki += 1
            raw[f"rv{li + 1}"] = 1.0 + 0.1 * jnp.abs(jax.random.normal(
                keys[ki], (fan_out,), dtype=jnp.float32)); ki += 1
    return raw


def fnn_reference(x, raw, eps=1e-5):
    """Pure-JAX f32 reference of the eval-mode PyTorch forward."""
    h = x @ raw["w1"] + raw["b1"]
    h = (h - raw["rm1"]) * jax.lax.rsqrt(raw["rv1"] + eps) * raw["g1"] + raw["be1"]
    h = jnp.maximum(h, 0.0)
    h = h @ raw["w2"] + raw["b2"]
    h = (h - raw["rm2"]) * jax.lax.rsqrt(raw["rv2"] + eps) * raw["g2"] + raw["be2"]
    h = jnp.maximum(h, 0.0)
    return h @ raw["w3"] + raw["b3"]


if __name__ == "__main__":
    # Small model dims; batch=256 -> auto-tiling gives 2 x 128-row tiles
    # (uses both TensorCores on v7x, fills MXU rows on all generations).
    batch, input_size = 256, 32
    hidden_layers = [64, 32]
    num_classes = 10

    key = jax.random.PRNGKey(0)
    kx, kp = jax.random.split(key)
    x = jax.random.normal(kx, (batch, input_size), dtype=jnp.float32)

    raw = init_params(kp, input_size, hidden_layers, num_classes)
    ops = fold_and_pad_params(raw)

    out = fnn_forward(x, ops, num_classes=num_classes)
    out = jax.block_until_ready(out)

    ref = fnn_reference(x, raw)
    assert out.shape == (batch, num_classes)
    out_f32 = out.astype(jnp.float32)
    # bf16 weights/activations/logits with f32 accumulation -> loose tolerance
    # vs the full-f32 reference of the module.
    err = float(jnp.max(jnp.abs(out_f32 - ref)))
    assert jnp.allclose(out_f32, ref, atol=5e-2, rtol=5e-2), err

    # TODO(synk): train-mode Dropout(0.2) and batch-statistics BatchNorm1d are
    # not modeled (eval-mode semantics implemented instead).
    print("KERNEL_OK")
</pallas_src>

<mosaic_0001>
module attributes {stable_mosaic.version = 11 : i64} {
  func.func @fnn_kernel(%arg0: i32, %arg1: memref<128x32xf32, #tpu.memory_space<vmem>>, %arg2: memref<32x128xbf16, #tpu.memory_space<vmem>>, %arg3: memref<1x128xf32, #tpu.memory_space<vmem>>, %arg4: memref<128x128xbf16, #tpu.memory_space<vmem>>, %arg5: memref<1x128xf32, #tpu.memory_space<vmem>>, %arg6: memref<128x128xbf16, #tpu.memory_space<vmem>>, %arg7: memref<1x128xf32, #tpu.memory_space<vmem>>, %arg8: memref<128x128xbf16, #tpu.memory_space<vmem>>) attributes {dimension_semantics = [#tpu.dimension_semantics<parallel>], iteration_bounds = array<i64: 2>, scalar_prefetch = 0 : i64, scratch_operands = 0 : i64, tpu.core_type = #tpu.core_type<tc>, window_params = [{transform_indices = @transform_0, window_bounds = array<i64: 128, 32>}, {pipeline_mode = #tpu.pipeline_mode<synchronous>, transform_indices = @transform_1, window_bounds = array<i64: 32, 128>}, {pipeline_mode = #tpu.pipeline_mode<synchronous>, transform_indices = @transform_2, window_bounds = array<i64: 1, 128>}, {pipeline_mode = #tpu.pipeline_mode<synchronous>, transform_indices = @transform_3, window_bounds = array<i64: 128, 128>}, {pipeline_mode = #tpu.pipeline_mode<synchronous>, transform_indices = @transform_4, window_bounds = array<i64: 1, 128>}, {pipeline_mode = #tpu.pipeline_mode<synchronous>, transform_indices = @transform_5, window_bounds = array<i64: 128, 128>}, {pipeline_mode = #tpu.pipeline_mode<synchronous>, transform_indices = @transform_6, window_bounds = array<i64: 1, 128>}, {transform_indices = @transform_7, window_bounds = array<i64: 128, 128>}]} {
    %c0 = arith.constant 0 : index
    %c0_0 = arith.constant 0 : index
    %0 = vector.load %arg1[%c0, %c0_0] : memref<128x32xf32, #tpu.memory_space<vmem>>, vector<128x32xf32>
    %1 = arith.truncf %0 : vector<128x32xf32> to vector<128x32xbf16>
    %c0_1 = arith.constant 0 : index
    %c0_2 = arith.constant 0 : index
    %2 = vector.load %arg2[%c0_1, %c0_2] : memref<32x128xbf16, #tpu.memory_space<vmem>>, vector<32x128xbf16>
    %cst = arith.constant dense<0.000000e+00> : vector<128x128xf32>
    %3 = tpu.matmul %1, %2, %cst {dimension_numbers = #tpu.dot_dimension_numbers<[1], [0], [0], [1], [0, 0, 1, 1], [], []>} : vector<128x32xbf16>, vector<32x128xbf16>, vector<128x128xf32> -> vector<128x128xf32>
    %c0_3 = arith.constant 0 : index
    %c0_4 = arith.constant 0 : index
    %4 = vector.load %arg3[%c0_3, %c0_4] : memref<1x128xf32, #tpu.memory_space<vmem>>, vector<1x128xf32>
    %5 = vector.broadcast %4 : vector<1x128xf32> to vector<128x128xf32>
    %6 = arith.addf %3, %5 : vector<128x128xf32>
    %cst_5 = arith.constant 0.000000e+00 : f32
    %7 = vector.broadcast %cst_5 : f32 to vector<128x128xf32>
    %8 = arith.maximumf %6, %7 : vector<128x128xf32>
    %9 = arith.truncf %8 : vector<128x128xf32> to vector<128x128xbf16>
    %c0_6 = arith.constant 0 : index
    %c0_7 = arith.constant 0 : index
    %10 = vector.load %arg4[%c0_6, %c0_7] : memref<128x128xbf16, #tpu.memory_space<vmem>>, vector<128x128xbf16>
    %cst_8 = arith.constant dense<0.000000e+00> : vector<128x128xf32>
    %11 = tpu.matmul %9, %10, %cst_8 {dimension_numbers = #tpu.dot_dimension_numbers<[1], [0], [0], [1], [0, 0, 1, 1], [], []>} : vector<128x128xbf16>, vector<128x128xbf16>, vector<128x128xf32> -> vector<128x128xf32>
    %c0_9 = arith.constant 0 : index
    %c0_10 = arith.constant 0 : index
    %12 = vector.load %arg5[%c0_9, %c0_10] : memref<1x128xf32, #tpu.memory_space<vmem>>, vector<1x128xf32>
    %13 = vector.broadcast %12 : vector<1x128xf32> to vector<128x128xf32>
    %14 = arith.addf %11, %13 : vector<128x128xf32>
    %cst_11 = arith.constant 0.000000e+00 : f32
    %15 = vector.broadcast %cst_11 : f32 to vector<128x128xf32>
    %16 = arith.maximumf %14, %15 : vector<128x128xf32>
    %17 = arith.truncf %16 : vector<128x128xf32> to vector<128x128xbf16>
    %c0_12 = arith.constant 0 : index
    %c0_13 = arith.constant 0 : index
    %18 = vector.load %arg6[%c0_12, %c0_13] : memref<128x128xbf16, #tpu.memory_space<vmem>>, vector<128x128xbf16>
    %cst_14 = arith.constant dense<0.000000e+00> : vector<128x128xf32>
    %19 = tpu.matmul %17, %18, %cst_14 {dimension_numbers = #tpu.dot_dimension_numbers<[1], [0], [0], [1], [0, 0, 1, 1], [], []>} : vector<128x128xbf16>, vector<128x128xbf16>, vector<128x128xf32> -> vector<128x128xf32>
    %c0_15 = arith.constant 0 : index
    %c0_16 = arith.constant 0 : index
    %20 = vector.load %arg7[%c0_15, %c0_16] : memref<1x128xf32, #tpu.memory_space<vmem>>, vector<1x128xf32>
    %21 = vector.broadcast %20 : vector<1x128xf32> to vector<128x128xf32>
    %22 = arith.addf %19, %21 : vector<128x128xf32>
    %23 = arith.truncf %22 : vector<128x128xf32> to vector<128x128xbf16>
    %c0_17 = arith.constant 0 : index
    %c0_18 = arith.constant 0 : index
    %24 = vector.load %arg8[%c0_17, %c0_18] : memref<128x128xbf16, #tpu.memory_space<vmem>>, vector<128x128xbf16>
    tpu.vector_store %arg8[%c0_17, %c0_18], %23 {strides = array<i32>} : memref<128x128xbf16, #tpu.memory_space<vmem>>, vector<128x128xbf16>,
    return
  }
  func.func @transform_0(%arg0: i32) -> (i32, i32) {
    %c0_i32 = arith.constant 0 : i32
    %c0_i32_0 = arith.constant 0 : i32
    return %arg0, %c0_i32 : i32, i32
  }
  func.func @transform_1(%arg0: i32) -> (i32, i32) {
    %c0_i32 = arith.constant 0 : i32
    %c0_i32_0 = arith.constant 0 : i32
    %c0_i32_1 = arith.constant 0 : i32
    return %c0_i32, %c0_i32_0 : i32, i32
  }
  func.func @transform_2(%arg0: i32) -> (i32, i32) {
    %c0_i32 = arith.constant 0 : i32
    %c0_i32_0 = arith.constant 0 : i32
    %c0_i32_1 = arith.constant 0 : i32
    return %c0_i32, %c0_i32_0 : i32, i32
  }
  func.func @transform_3(%arg0: i32) -> (i32, i32) {
    %c0_i32 = arith.constant 0 : i32
    %c0_i32_0 = arith.constant 0 : i32
    %c0_i32_1 = arith.constant 0 : i32
    return %c0_i32, %c0_i32_0 : i32, i32
  }
  func.func @transform_4(%arg0: i32) -> (i32, i32) {
    %c0_i32 = arith.constant 0 : i32
    %c0_i32_0 = arith.constant 0 : i32
    %c0_i32_1 = arith.constant 0 : i32
    return %c0_i32, %c0_i32_0 : i32, i32
  }
  func.func @transform_5(%arg0: i32) -> (i32, i32) {
    %c0_i32 = arith.constant 0 : i32
    %c0_i32_0 = arith.constant 0 : i32
    %c0_i32_1 = arith.constant 0 : i32
    return %c0_i32, %c0_i32_0 : i32, i32
  }
  func.func @transform_6(%arg0: i32) -> (i32, i32) {
    %c0_i32 = arith.constant 0 : i32
    %c0_i32_0 = arith.constant 0 : i32
    %c0_i32_1 = arith.constant 0 : i32
    return %c0_i32, %c0_i32_0 : i32, i32
  }
  func.func @transform_7(%arg0: i32) -> (i32, i32) {
    %c0_i32 = arith.constant 0 : i32
    %c0_i32_0 = arith.constant 0 : i32
    return %arg0, %c0_i32 : i32, i32
  }
}

</mosaic_0001>

<llo_original>
// kernel: fnn_forward.1
$region0: #{fnn_forward.1}
  #allocation0 [shape = 'u32[]', space=smem, size = 0x4, offset = 0x4, fixed_abs, tag = 'smem constant byte address 0x4 - core index']
  #allocation1 [shape = 'u32[144,128]{1,0:T(1,128)}', space=vmem, size = 0x12000, scoped, tag = 'internal scratch']
  %s0 = inlined_call_operand.vmem [shape: f32[256,32], index: 0, kind: input, shape index: {}]
  %s1 = inlined_call_operand.vmem [shape: bf16[32,128], index: 1, kind: input, shape index: {}]
  %s2 = inlined_call_operand.vmem [shape: f32[1,128], index: 2, kind: input, shape index: {}]
  %s3 = inlined_call_operand.vmem [shape: bf16[128,128], index: 3, kind: input, shape index: {}]
  %s4 = inlined_call_operand.vmem [shape: f32[1,128], index: 4, kind: input, shape index: {}]
  %s5 = inlined_call_operand.vmem [shape: bf16[128,128], index: 5, kind: input, shape index: {}]
  %s6 = inlined_call_operand.vmem [shape: f32[1,128], index: 6, kind: input, shape index: {}]
  %s7 = inlined_call_operand.vmem [shape: bf16[256,128], index: 7, kind: output, shape index: {}]
  %s8 = sld [smem:[#allocation0]]
  $region61: #{fnn_forward.1} parent=0
    _
  %s10 = ssub.s32 1, %s8
  %s11 = scalar_select 0, %s10, %s8
  loop: start=0, step=1, limit=4
  $region2: #{fnn_forward.1} parent=0 // loop_pre_header
    _
  $region3: #{fnn_forward.1} parent=0 // loop_header
    %s13 = sphi 0, %s17
    %p14 = scmp.ge.s32.totalorder %s13, 4
    %s23 = sphi 0, %s25
    %s26 = sphi 0, %s23
    %s27 = sphi 0, %s26
    %s43 = sphi 0, %s27
    %s47 = sphi 0, %s47
    %s49 = sphi 0, %s47
    %s50 = sphi 0, %s49
    %s64 = sphi 0, %s50
    %s68 = sphi 0, %s68
    %s70 = sphi 0, %s68
    %s71 = sphi 0, %s70
    %s85 = sphi 0, %s71
    %s89 = sphi 0, %s89
    %s91 = sphi 0, %s89
    %s92 = sphi 0, %s91
    %s106 = sphi 0, %s92
    %s110 = sphi 0, %s110
    %s112 = sphi 0, %s110
    %s113 = sphi 0, %s112
    %s127 = sphi 0, %s113
    %s131 = sphi 0, %s131
    %s133 = sphi 0, %s131
    %s134 = sphi 0, %s133
    %s148 = sphi 0, %s134
    %s152 = sphi 0, %s152
    %s154 = sphi 0, %s152
    %s155 = sphi 0, %s154
    %s169 = sphi 0, %s155
    %s175 = sphi 0, %s177
    %s178 = sphi 0, %s175
    %s179 = sphi 0, %s178
    %s195 = sphi 0, %s179
  $region4: #{fnn_forward.1} parent=0 // loop_header_branch
    %16 = sbr.rel (%p14) target = $region8
  $region5: #{fnn_forward.1} parent=0 // loop_body
    %s18 = ssub.s32 %s13, 1
    %s19 = ssub.s32 %s13, 2
    %s20 = sadd.s32 %s13, 1
    %s21 = ssub.s32 %s13, %s20
    %p22 = scmp.eq.s32.totalorder %s21, 0
    %s24 = sadd.s32 %s23, 1
    %s25 = scalar_select %p22, %s23, %s24
    %p28 = pneg %p22
    %p29 = scmp.eq.s32.totalorder %s13, 1
    %p30 = por %p28, %p29
    %p31 = scmp.ne.s32.totalorder %s23, %s26
    %p32 = scmp.eq.s32.totalorder %s13, 0
    %p33 = por %p31, %p32
    %p34 = scmp.ne.s32.totalorder %s23, %s26
    %p35 = scmp.eq.s32.totalorder %s18, 1
    %p36 = por %p34, %p35
    %p37 = scmp.ne.s32.totalorder %s26, %s27
    %p38 = scmp.eq.s32.totalorder %s18, 0
    %p39 = por %p37, %p38
    %p40 = scmp.ne.s32.totalorder %s26, %s27
    %p41 = scmp.eq.s32.totalorder %s19, 1
    %p42 = por %p40, %p41
    %p44 = scmp.ne.s32.totalorder %s27, %s43
    %p45 = scmp.eq.s32.totalorder %s19, 0
    %p46 = por %p44, %p45
    %s48 = sadd.s32 %s47, 1
    %p51 = scmp.eq.s32.totalorder %s13, 1
    %p52 = scmp.ne.s32.totalorder %s47, %s49
    %p53 = scmp.eq.s32.totalorder %s13, 0
    %p54 = por %p52, %p53
    %p55 = scmp.ne.s32.totalorder %s47, %s49
    %p56 = scmp.eq.s32.totalorder %s18, 1
    %p57 = por %p55, %p56
    %p58 = scmp.ne.s32.totalorder %s49, %s50
    %p59 = scmp.eq.s32.totalorder %s18, 0
    %p60 = por %p58, %p59
    %p61 = scmp.ne.s32.totalorder %s49, %s50
    %p62 = scmp.eq.s32.totalorder %s19, 1
    %p63 = por %p61, %p62
    %p65 = scmp.ne.s32.totalorder %s50, %s64
    %p66 = scmp.eq.s32.totalorder %s19, 0
    %p67 = por %p65, %p66
    %s69 = sadd.s32 %s68, 1
    %p72 = scmp.eq.s32.totalorder %s13, 1
    %p73 = scmp.ne.s32.totalorder %s68, %s70
    %p74 = scmp.eq.s32.totalorder %s13, 0
    %p75 = por %p73, %p74
    %p76 = scmp.ne.s32.totalorder %s68, %s70
    %p77 = scmp.eq.s32.totalorder %s18, 1
    %p78 = por %p76, %p77
    %p79 = scmp.ne.s32.totalorder %s70, %s71
    %p80 = scmp.eq.s32.totalorder %s18, 0
    %p81 = por %p79, %p80
    %p82 = scmp.ne.s32.totalorder %s70, %s71
    %p83 = scmp.eq.s32.totalorder %s19, 1
    %p84 = por %p82, %p83
    %p86 = scmp.ne.s32.totalorder %s71, %s85
    %p87 = scmp.eq.s32.totalorder %s19, 0
    %p88 = por %p86, %p87
    %s90 = sadd.s32 %s89, 1
    %p93 = scmp.eq.s32.totalorder %s13, 1
    %p94 = scmp.ne.s32.totalorder %s89, %s91
    %p95 = scmp.eq.s32.totalorder %s13, 0
    %p96 = por %p94, %p95
    %p97 = scmp.ne.s32.totalorder %s89, %s91
    %p98 = scmp.eq.s32.totalorder %s18, 1
    %p99 = por %p97, %p98
    %p100 = scmp.ne.s32.totalorder %s91, %s92
    %p101 = scmp.eq.s32.totalorder %s18, 0
    %p102 = por %p100, %p101
    %p103 = scmp.ne.s32.totalorder %s91, %s92
    %p104 = scmp.eq.s32.totalorder %s19, 1
    %p105 = por %p103, %p104
    %p107 = scmp.ne.s32.totalorder %s92, %s106
    %p108 = scmp.eq.s32.totalorder %s19, 0
    %p109 = por %p107, %p108
    %s111 = sadd.s32 %s110, 1
    %p114 = scmp.eq.s32.totalorder %s13, 1
    %p115 = scmp.ne.s32.totalorder %s110, %s112
    %p116 = scmp.eq.s32.totalorder %s13, 0
    %p117 = por %p115, %p116
    %p118 = scmp.ne.s32.totalorder %s110, %s112
    %p119 = scmp.eq.s32.totalorder %s18, 1
    %p120 = por %p118, %p119
    %p121 = scmp.ne.s32.totalorder %s112, %s113
    %p122 = scmp.eq.s32.totalorder %s18, 0
    %p123 = por %p121, %p122
    %p124 = scmp.ne.s32.totalorder %s112, %s113
    %p125 = scmp.eq.s32.totalorder %s19, 1
    %p126 = por %p124, %p125
    %p128 = scmp.ne.s32.totalorder %s113, %s127
    %p129 = scmp.eq.s32.totalorder %s19, 0
    %p130 = por %p128, %p129
    %s132 = sadd.s32 %s131, 1
    %p135 = scmp.eq.s32.totalorder %s13, 1
    %p136 = scmp.ne.s32.totalorder %s131, %s133
    %p137 = scmp.eq.s32.totalorder %s13, 0
    %p138 = por %p136, %p137
    %p139 = scmp.ne.s32.totalorder %s131, %s133
    %p140 = scmp.eq.s32.totalorder %s18, 1
    %p141 = por %p139, %p140
    %p142 = scmp.ne.s32.totalorder %s133, %s134
    %p143 = scmp.eq.s32.totalorder %s18, 0
    %p144 = por %p142, %p143
    %p145 = scmp.ne.s32.totalorder %s133, %s134
    %p146 = scmp.eq.s32.totalorder %s19, 1
    %p147 = por %p145, %p146
    %p149 = scmp.ne.s32.totalorder %s134, %s148
    %p150 = scmp.eq.s32.totalorder %s19, 0
    %p151 = por %p149, %p150
    %s153 = sadd.s32 %s152, 1
    %p156 = scmp.eq.s32.totalorder %s13, 1
    %p157 = scmp.ne.s32.totalorder %s152, %s154
    %p158 = scmp.eq.s32.totalorder %s13, 0
    %p159 = por %p157, %p158
    %p160 = scmp.ne.s32.totalorder %s152, %s154
    %p161 = scmp.eq.s32.totalorder %s18, 1
    %p162 = por %p160, %p161
    %p163 = scmp.ne.s32.totalorder %s154, %s155
    %p164 = scmp.eq.s32.totalorder %s18, 0
    %p165 = por %p163, %p164
    %p166 = scmp.ne.s32.totalorder %s154, %s155
    %p167 = scmp.eq.s32.totalorder %s19, 1
    %p168 = por %p166, %p167
    %p170 = scmp.ne.s32.totalorder %s155, %s169
    %p171 = scmp.eq.s32.totalorder %s19, 0
    %p172 = por %p170, %p171
    %s173 = ssub.s32 %s13, %s20
    %p174 = scmp.eq.s32.totalorder %s173, 0
    %s176 = sadd.s32 %s175, 1
    %s177 = scalar_select %p174, %s175, %s176
    %p180 = pneg %p174
    %p181 = scmp.eq.s32.totalorder %s13, 1
    %p182 = por %p180, %p181
    %p183 = scmp.ne.s32.totalorder %s175, %s178
    %p184 = scmp.eq.s32.totalorder %s13, 0
    %p185 = por %p183, %p184
    %p186 = scmp.ne.s32.totalorder %s175, %s178
    %p187 = scmp.eq.s32.totalorder %s18, 1
    %p188 = por %p186, %p187
    %p189 = scmp.ne.s32.totalorder %s178, %s179
    %p190 = scmp.eq.s32.totalorder %s18, 0
    %p191 = por %p189, %p190
    %p192 = scmp.ne.s32.totalorder %s178, %s179
    %p193 = scmp.eq.s32.totalorder %s19, 1
    %p194 = por %p192, %p193
    %p196 = scmp.ne.s32.totalorder %s179, %s195
    %p197 = scmp.eq.s32.totalorder %s19, 0
    %p198 = por %p196, %p197
    %p199 = scmp.le.s32.totalorder 1, %s13
    %p200 = scmp.lt.s32.totalorder %s13, 3
    %p201 = pnand %p199, %p200
    %p202 = pneg %p201
    // Predicated region
    $region9: #{fnn_forward.1} parent=5 // pred_check
      _
    $region10: #{fnn_forward.1} parent=5 // pred_check_branch
      %204 = sbr.rel (%p201) target = $region12
    $region11: #{fnn_forward.1} parent=5 // pred_region
      %s205 = ssub.s32 %s13, 1
      // Predicated region
      $region13: #{fnn_forward.1} parent=11 // pred_check
        %p206 = pneg %p60
      $region14: #{fnn_forward.1} parent=11 // pred_check_branch
        %208 = sbr.rel (%p206) target = $region16
      $region15: #{fnn_forward.1} parent=11 // pred_region
        _
      $region16: #{fnn_forward.1} parent=11 // pred_fallthru
        _
      // Predicated region
      $region17: #{fnn_forward.1} parent=11 // pred_check
        %p209 = pneg %p81
      $region18: #{fnn_forward.1} parent=11 // pred_check_branch
        %211 = sbr.rel (%p209) target = $region20
      $region19: #{fnn_forward.1} parent=11 // pred_region
        _
      $region20: #{fnn_forward.1} parent=11 // pred_fallthru
        _
      // Predicated region
      $region21: #{fnn_forward.1} parent=11 // pred_check
        %p212 = pneg %p102
      $region22: #{fnn_forward.1} parent=11 // pred_check_branch
        %214 = sbr.rel (%p212) target = $region24
      $region23: #{fnn_forward.1} parent=11 // pred_region
        _
      $region24: #{fnn_forward.1} parent=11 // pred_fallthru
        _
      // Predicated region
      $region25: #{fnn_forward.1} parent=11 // pred_check
        %p215 = pneg %p123
      $region26: #{fnn_forward.1} parent=11 // pred_check_branch
        %217 = sbr.rel (%p215) target = $region28
      $region27: #{fnn_forward.1} parent=11 // pred_region
        _
      $region28: #{fnn_forward.1} parent=11 // pred_fallthru
        _
      // Predicated region
      $region29: #{fnn_forward.1} parent=11 // pred_check
        %p218 = pneg %p144
      $region30: #{fnn_forward.1} parent=11 // pred_check_branch
        %220 = sbr.rel (%p218) target = $region32
      $region31: #{fnn_forward.1} parent=11 // pred_region
        _
      $region32: #{fnn_forward.1} parent=11 // pred_fallthru
        _
      // Predicated region
      $region33: #{fnn_forward.1} parent=11 // pred_check
        %p221 = pneg %p165
      $region34: #{fnn_forward.1} parent=11 // pred_check_branch
        %223 = sbr.rel (%p221) target = $region36
      $region35: #{fnn_forward.1} parent=11 // pred_region
        _
      $region36: #{fnn_forward.1} parent=11 // pred_fallthru
        _
    $region12: #{fnn_forward.1} parent=5 // pred_fallthru
      _
    %p224 = scmp.lt.s32.totalorder %s13, 2
    // Predicated region
    $region37: #{fnn_forward.1} parent=5 // pred_check
      %p225 = pneg %p224
    $region38: #{fnn_forward.1} parent=5 // pred_check_branch
      %227 = sbr.rel (%p225) target = $region40
    $region39: #{fnn_forward.1} parent=5 // pred_region
      // Predicated region
      $region41: #{fnn_forward.1} parent=39 // pred_check
        %p228 = pneg %p33
      $region42: #{fnn_forward.1} parent=39 // pred_check_branch
        %230 = sbr.rel (%p228) target = $region44
      $region43: #{fnn_forward.1} parent=39 // pred_region
        %s231 = smul.u32 16, %s13
        %p232 = scmp.lt.s32.totalorder %s231, 31
        %s233 = scalar_select %p232, %s231, 31
        %s234 = smul.addr %s233, 8
        %s235 = scalar_lea.vmem %s0, %s234
        %s236 = smul.u32 16, %s13
      $region44: #{fnn_forward.1} parent=39 // pred_fallthru
        _
    $region40: #{fnn_forward.1} parent=5 // pred_fallthru
      _
    %p237 = scmp.le.s32.totalorder 1, %s13
    %p238 = scmp.lt.s32.totalorder %s13, 3
    %p239 = pnand %p237, %p238
    %p240 = pneg %p239
    // Predicated region
    $region45: #{fnn_forward.1} parent=5 // pred_check
      _
    $region46: #{fnn_forward.1} parent=5 // pred_check_branch
      %242 = sbr.rel (%p239) target = $region48
    $region47: #{fnn_forward.1} parent=5 // pred_region
      %s243 = ssub.s32 %s13, 1
      %s244 = smul.u32 16, %s18
      %p245 = scmp.lt.s32.totalorder %s244, 31
      %s246 = scalar_select %p245, %s244, 31
      %s247 = smul.addr %s246, 8
      %s248 = scalar_lea.vmem %s0, %s247
      %p249 = pneg %p39
      %p250 = pneg %p36
      %p251 = pneg %p60
      %p252 = pneg %p57
      %p253 = pneg %p81
      %p254 = pneg %p78
      %p255 = pneg %p102
      %p256 = pneg %p99
      %p257 = pneg %p123
      %p258 = pneg %p120
      %p259 = pneg %p144
      %p260 = pneg %p141
      %p261 = pneg %p165
      %p262 = pneg %p162
      %p263 = pneg %p191
      %p264 = pneg %p188
      %s265 = smul.u32 16, %s18
      %p266 = scmp.lt.s32.totalorder %s265, 31
      %s267 = scalar_select %p266, %s265, 31
      %s268 = smul.addr %s267, 4
      %s269 = scalar_lea.vmem %s7, %s268
      %s270 = smul.u32 16, %s18
      %p271 = scmp.lt.s32.totalorder %s270, 31
      %s272 = scalar_select %p271, %s270, 31
      %s273 = smul.addr %s272, 8
      %s274 = scalar_lea.vmem %s0, %s273
      %s275 = smul.u32 16, %s18
      %s276 = smul.u32 16, %s18
      %p277 = scmp.lt.s32.totalorder %s276, 31
      %s278 = scalar_select %p277, %s276, 31
      %s279 = smul.addr %s278, 4
      %s280 = scalar_lea.vmem %s7, %s279
      %s281 = smul.u32 16, %s18
      %v283 = vld [vmem:[%s274] sm:$0xff]
      %v284 = vld [vmem:[%s274 + $0x8] sm:$0xff]
      %v285 = vld [vmem:[%s274 + $0x10] sm:$0xff]
      %v286 = vld [vmem:[%s274 + $0x18] sm:$0xff]
      %v287 = vld [vmem:[%s274 + $0x20] sm:$0xff]
      %v288 = vld [vmem:[%s274 + $0x28] sm:$0xff]
      %v289 = vld [vmem:[%s274 + $0x30] sm:$0xff]
      %v290 = vld [vmem:[%s274 + $0x38] sm:$0xff]
      %v291 = vld [vmem:[%s274 + $0x40] sm:$0xff]
      %v292 = vld [vmem:[%s274 + $0x48] sm:$0xff]
      %v293 = vld [vmem:[%s274 + $0x50] sm:$0xff]
      %v294 = vld [vmem:[%s274 + $0x58] sm:$0xff]
      %v295 = vld [vmem:[%s274 + $0x60] sm:$0xff]
      %v296 = vld [vmem:[%s274 + $0x68] sm:$0xff]
      %v297 = vld [vmem:[%s274 + $0x70] sm:$0xff]
      %v298 = vld [vmem:[%s274 + $0x78] sm:$0xff]
      %v299 = vpack.c.bf16 %v284, %v283
      %v300 = vpack.c.bf16 %v286, %v285
      %v301 = vpack.c.bf16 %v288, %v287
      %v302 = vpack.c.bf16 %v290, %v289
      %v303 = vpack.c.bf16 %v292, %v291
      %v304 = vpack.c.bf16 %v294, %v293
      %v305 = vpack.c.bf16 %v296, %v295
      %v306 = vpack.c.bf16 %v298, %v297
      %v307 = vld [vmem:[%s1] sm:$0xf]
      %v308 = vld [vmem:[%s1 + $0x4] sm:$0xf]
      %v309 = vld [vmem:[%s1 + $0x8] sm:$0xf]
      %v310 = vld [vmem:[%s1 + $0xc] sm:$0xf]
      %v311 = vld [vmem:[%s2] sm:$0x1]
      %v313 = vlaneseq
      %v314 = vshrl.u32 %v313, 7
      %v315 = vsub.s32 0, %v314
      %v316 = vrot.slane %v311, %v315
      %v322 = vunpack.c.l.b16 %v307
      %v323 = vunpack.c.l.b16 %v308
      %v324 = vunpack.c.l.b16 %v309
      %v325 = vunpack.c.l.b16 %v310
      %v326 = vpack.c.b16 %v323, %v322
      %v327 = vpack.c.b16 %v325, %v324
      %vm330 = vcmask 261120
      %v332 = vsel %vm330, %v299, 0
      %v335 = vsel %vm330, %v300, 0
      %v338 = vsel %vm330, %v301, 0
      %v341 = vsel %vm330, %v302, 0
      %v344 = vsel %vm330, %v303, 0
      %v347 = vsel %vm330, %v304, 0
      %v350 = vsel %vm330, %v305, 0
      %v353 = vsel %vm330, %v306, 0
      %355 = vmatprep.subr.bf16.mxu0 0
      %356 = vmatpush1.bf16.msra.mxu0 %v326
      %357 = vmatprep.subr.bf16.mxu0 0
      %358 = vmatpush1.bf16.msra.mxu0 %v327
      %359 = vmatprep.subr.bf16.mxu0 0
      %360 = vmatpush1.bf16.msra.mxu0 0
      %361 = vmatprep.subr.bf16.mxu0 0
      %362 = vmatpush1.bf16.msra.mxu0 0
      %363 = vmatprep.subr.bf16.mxu0 0
      %364 = vmatpush1.bf16.msra.mxu0 0
      %365 = vmatprep.subr.bf16.mxu0 0
      %366 = vmatpush1.bf16.msra.mxu0 0
      %367 = vmatprep.subr.bf16.mxu0 0
      %368 = vmatpush1.bf16.msra.mxu0 0
      %369 = vmatprep.subr.bf16.mxu0 0
      %370 = vmatpush1.bf16.msra.mxu0 0
      %371 = vmatprep.subr.bf16.mxu0 0
      %372 = vmatpush1.bf16.msra.mxu0 0
      %373 = vmatprep.subr.bf16.mxu0 0
      %374 = vmatpush1.bf16.msra.mxu0 0
      %375 = vmatprep.subr.bf16.mxu0 0
      %376 = vmatpush1.bf16.msra.mxu0 0
      %377 = vmatprep.subr.bf16.mxu0 0
      %378 = vmatpush1.bf16.msra.mxu0 0
      %379 = vmatprep.subr.bf16.mxu0 0
      %380 = vmatpush1.bf16.msra.mxu0 0
      %381 = vmatprep.subr.bf16.mxu0 0
      %382 = vmatpush1.bf16.msra.mxu0 0
      %383 = vmatprep.subr.bf16.mxu0 0
      %384 = vmatpush1.bf16.msra.mxu0 0
      %385 = vmatprep.subr.bf16.mxu0 0
      %386 = vmatpush1.bf16.msra.mxu0 0
      %387 = vmatprep.mubr.bf16.mxu0 0
      %388 = vmatmul.mubr.bf16.gmra.mrb[0].mxu0 %v332
      %v389 = vpop.f32.mrb[0].mxu0
      %v390 = vadd.f32 %v316, %v389
      %v391 = vpop.f32.mrb[0].mxu0
      %v392 = vpop.f32.mrb[0].mxu0
      %v393 = vadd.f32 %v316, %v392
      %v394 = vpop.f32.mrb[0].mxu0
      %395 = vmatprep.mubr.bf16.mxu0 0
      %396 = vmatmul.mubr.bf16.gmra.mrb[0].mxu0 %v335
      %v397 = vpop.f32.mrb[0].mxu0
      %v398 = vadd.f32 %v316, %v397
      %v399 = vpop.f32.mrb[0].mxu0
      %v400 = vpop.f32.mrb[0].mxu0
      %v401 = vadd.f32 %v316, %v400
      %v402 = vpop.f32.mrb[0].mxu0
      %403 = vmatprep.mubr.bf16.mxu0 0
      %404 = vmatmul.mubr.bf16.gmra.mrb[0].mxu0 %v338
      %v405 = vpop.f32.mrb[0].mxu0
      %v406 = vadd.f32 %v316, %v405
      %v407 = vpop.f32.mrb[0].mxu0
      %v408 = vpop.f32.mrb[0].mxu0
      %v409 = vadd.f32 %v316, %v408
      %v410 = vpop.f32.mrb[0].mxu0
      %411 = vmatprep.mubr.bf16.mxu0 0
      %412 = vmatmul.mubr.bf16.gmra.mrb[0].mxu0 %v341
      %v413 = vpop.f32.mrb[0].mxu0
      %v414 = vadd.f32 %v316, %v413
      %v415 = vpop.f32.mrb[0].mxu0
      %v416 = vpop.f32.mrb[0].mxu0
      %v417 = vadd.f32 %v316, %v416
      %v418 = vpop.f32.mrb[0].mxu0
      %419 = vmatprep.mubr.bf16.mxu0 0
      %420 = vmatmul.mubr.bf16.gmra.mrb[0].mxu0 %v344
      %v421 = vpop.f32.mrb[0].mxu0
      %v422 = vadd.f32 %v316, %v421
      %v423 = vpop.f32.mrb[0].mxu0
      %v424 = vpop.f32.mrb[0].mxu0
      %v425 = vadd.f32 %v316, %v424
      %v426 = vpop.f32.mrb[0].mxu0
      %427 = vmatprep.mubr.bf16.mxu0 0
      %428 = vmatmul.mubr.bf16.gmra.mrb[0].mxu0 %v347
      %v429 = vpop.f32.mrb[0].mxu0
      %v430 = vadd.f32 %v316, %v429
      %v431 = vpop.f32.mrb[0].mxu0
      %v432 = vpop.f32.mrb[0].mxu0
      %v433 = vadd.f32 %v316, %v432
      %v434 = vpop.f32.mrb[0].mxu0
      %435 = vmatprep.mubr.bf16.mxu0 0
      %436 = vmatmul.mubr.bf16.gmra.mrb[0].mxu0 %v350
      %v437 = vpop.f32.mrb[0].mxu0
      %v438 = vadd.f32 %v316, %v437
      %v439 = vpop.f32.mrb[0].mxu0
      %v440 = vpop.f32.mrb[0].mxu0
      %v441 = vadd.f32 %v316, %v440
      %v442 = vpop.f32.mrb[0].mxu0
      %443 = vmatprep.mubr.bf16.mxu0 0
      %444 = vmatmul.mubr.bf16.gmra.mrb[0].mxu0 %v353
      %v445 = vpop.f32.mrb[0].mxu0
      %v446 = vadd.f32 %v316, %v445
      %v447 = vpop.f32.mrb[0].mxu0
      %v448 = vpop.f32.mrb[0].mxu0
      %v449 = vadd.f32 %v316, %v448
      %v450 = vpop.f32.mrb[0].mxu0
      %451 = vdwg.mxu0
      %v452 = vmax.f32 %v390, 0.0
      %v453 = vmax.f32 %v393, 0.0
      %v454 = vmax.f32 %v398, 0.0
      %v455 = vmax.f32 %v401, 0.0
      %v456 = vmax.f32 %v406, 0.0
      %v457 = vmax.f32 %v409, 0.0
      %v458 = vmax.f32 %v414, 0.0
      %v459 = vmax.f32 %v417, 0.0
      %v460 = vmax.f32 %v422, 0.0
      %v461 = vmax.f32 %v425, 0.0
      %v462 = vmax.f32 %v430, 0.0
      %v463 = vmax.f32 %v433, 0.0
      %v464 = vmax.f32 %v438, 0.0
      %v465 = vmax.f32 %v441, 0.0
      %v466 = vmax.f32 %v446, 0.0
      %v467 = vmax.f32 %v449, 0.0
      %v468 = vpack.c.bf16 %v453, %v452
      %v469 = vpack.c.bf16 %v455, %v454
      %v470 = vpack.c.bf16 %v457, %v456
      %v471 = vpack.c.bf16 %v459, %v458
      %v472 = vpack.c.bf16 %v461, %v460
      %v473 = vpack.c.bf16 %v463, %v462
      %v474 = vpack.c.bf16 %v465, %v464
      %v475 = vpack.c.bf16 %v467, %v466
      %v476 = vld [vmem:[%s3] sm:$0xf]
      %v477 = vld [vmem:[%s3 + $0x4] sm:$0xf]
      %v478 = vld [vmem:[%s3 + $0x8] sm:$0xf]
      %v479 = vld [vmem:[%s3 + $0xc] sm:$0xf]
      %v480 = vld [vmem:[%s3 + $0x10] sm:$0xf]
      %v481 = vld [vmem:[%s3 + $0x14] sm:$0xf]
      %v482 = vld [vmem:[%s3 + $0x18] sm:$0xf]
      %v483 = vld [vmem:[%s3 + $0x1c] sm:$0xf]
      %v484 = vld [vmem:[%s3 + $0x20] sm:$0xf]
      %v485 = vld [vmem:[%s3 + $0x24] sm:$0xf]
      %v486 = vld [vmem:[%s3 + $0x28] sm:$0xf]
      %v487 = vld [vmem:[%s3 + $0x2c] sm:$0xf]
      %v488 = vld [vmem:[%s3 + $0x30] sm:$0xf]
      %v489 = vld [vmem:[%s3 + $0x34] sm:$0xf]
      %v490 = vld [vmem:[%s3 + $0x38] sm:$0xf]
      %v491 = vld [vmem:[%s3 + $0x3c] sm:$0xf]
      %v492 = vld [vmem:[%s4] sm:$0x1]
      %v494 = vlaneseq
      %v495 = vshrl.u32 %v494, 7
      %v496 = vsub.s32 0, %v495
      %v497 = vrot.slane %v492, %v496
      %v515 = vunpack.c.l.b16 %v476
      %v516 = vunpack.c.l.b16 %v477
      %v517 = vunpack.c.l.b16 %v478
      %v518 = vunpack.c.l.b16 %v479
      %v519 = vunpack.c.l.b16 %v480
      %v520 = vunpack.c.l.b16 %v481
      %v521 = vunpack.c.l.b16 %v482
      %v522 = vunpack.c.l.b16 %v483
      %v523 = vunpack.c.l.b16 %v484
      %v524 = vunpack.c.l.b16 %v485
      %v525 = vunpack.c.l.b16 %v486
      %v526 = vunpack.c.l.b16 %v487
      %v527 = vunpack.c.l.b16 %v488
      %v528 = vunpack.c.l.b16 %v489
      %v529 = vunpack.c.l.b16 %v490
      %v530 = vunpack.c.l.b16 %v491
      %v531 = vpack.c.b16 %v516, %v515
      %v532 = vpack.c.b16 %v518, %v517
      %v533 = vpack.c.b16 %v520, %v519
      %v534 = vpack.c.b16 %v522, %v521
      %v535 = vpack.c.b16 %v524, %v523
      %v536 = vpack.c.b16 %v526, %v525
      %v537 = vpack.c.b16 %v528, %v527
      %v538 = vpack.c.b16 %v530, %v529
      %547 = vmatprep.subr.bf16.mxu0 0
      %548 = vmatpush1.bf16.msra.mxu0 %v531
      %549 = vmatprep.subr.bf16.mxu0 0
      %550 = vmatpush1.bf16.msra.mxu0 %v532
      %551 = vmatprep.subr.bf16.mxu0 0
      %552 = vmatpush1.bf16.msra.mxu0 %v533
      %553 = vmatprep.subr.bf16.mxu0 0
      %554 = vmatpush1.bf16.msra.mxu0 %v534
      %555 = vmatprep.subr.bf16.mxu0 0
      %556 = vmatpush1.bf16.msra.mxu0 %v535
      %557 = vmatprep.subr.bf16.mxu0 0
      %558 = vmatpush1.bf16.msra.mxu0 %v536
      %559 = vmatprep.subr.bf16.mxu0 0
      %560 = vmatpush1.bf16.msra.mxu0 %v537
      %561 = vmatprep.subr.bf16.mxu0 0
      %562 = vmatpush1.bf16.msra.mxu0 %v538
      %563 = vmatprep.subr.bf16.mxu0 0
      %564 = vmatpush1.bf16.msra.mxu0 0
      %565 = vmatprep.subr.bf16.mxu0 0
      %566 = vmatpush1.bf16.msra.mxu0 0
      %567 = vmatprep.subr.bf16.mxu0 0
      %568 = vmatpush1.bf16.msra.mxu0 0
      %569 = vmatprep.subr.bf16.mxu0 0
      %570 = vmatpush1.bf16.msra.mxu0 0
      %571 = vmatprep.subr.bf16.mxu0 0
      %572 = vmatpush1.bf16.msra.mxu0 0
      %573 = vmatprep.subr.bf16.mxu0 0
      %574 = vmatpush1.bf16.msra.mxu0 0
      %575 = vmatprep.subr.bf16.mxu0 0
      %576 = vmatpush1.bf16.msra.mxu0 0
      %577 = vmatprep.subr.bf16.mxu0 0
      %578 = vmatpush1.bf16.msra.mxu0 0
      %579 = vmatprep.mubr.bf16.mxu0 0
      %580 = vmatmul.mubr.bf16.gmra.mrb[0].mxu0 %v468
      %v581 = vpop.f32.mrb[0].mxu0
      %v582 = vadd.f32 %v497, %v581
      %v583 = vpop.f32.mrb[0].mxu0
      %v584 = vpop.f32.mrb[0].mxu0
      %v585 = vadd.f32 %v497, %v584
      %v586 = vpop.f32.mrb[0].mxu0
      %587 = vmatprep.mubr.bf16.mxu0 0
      %588 = vmatmul.mubr.bf16.gmra.mrb[0].mxu0 %v469
      %v589 = vpop.f32.mrb[0].mxu0
      %v590 = vadd.f32 %v497, %v589
      %v591 = vpop.f32.mrb[0].mxu0
      %v592 = vpop.f32.mrb[0].mxu0
      %v593 = vadd.f32 %v497, %v592
      %v594 = vpop.f32.mrb[0].mxu0
      %595 = vmatprep.mubr.bf16.mxu0 0
      %596 = vmatmul.mubr.bf16.gmra.mrb[0].mxu0 %v470
      %v597 = vpop.f32.mrb[0].mxu0
      %v598 = vadd.f32 %v497, %v597
      %v599 = vpop.f32.mrb[0].mxu0
      %v600 = vpop.f32.mrb[0].mxu0
      %v601 = vadd.f32 %v497, %v600
      %v602 = vpop.f32.mrb[0].mxu0
      %603 = vmatprep.mubr.bf16.mxu0 0
      %604 = vmatmul.mubr.bf16.gmra.mrb[0].mxu0 %v471
      %v605 = vpop.f32.mrb[0].mxu0
      %v606 = vadd.f32 %v497, %v605
      %v607 = vpop.f32.mrb[0].mxu0
      %v608 = vpop.f32.mrb[0].mxu0
      %v609 = vadd.f32 %v497, %v608
      %v610 = vpop.f32.mrb[0].mxu0
      %611 = vmatprep.mubr.bf16.mxu0 0
      %612 = vmatmul.mubr.bf16.gmra.mrb[0].mxu0 %v472
      %v613 = vpop.f32.mrb[0].mxu0
      %v614 = vadd.f32 %v497, %v613
      %v615 = vpop.f32.mrb[0].mxu0
      %v616 = vpop.f32.mrb[0].mxu0
      %v617 = vadd.f32 %v497, %v616
      %v618 = vpop.f32.mrb[0].mxu0
      %619 = vmatprep.mubr.bf16.mxu0 0
      %620 = vmatmul.mubr.bf16.gmra.mrb[0].mxu0 %v473
      %v621 = vpop.f32.mrb[0].mxu0
      %v622 = vadd.f32 %v497, %v621
      %v623 = vpop.f32.mrb[0].mxu0
      %v624 = vpop.f32.mrb[0].mxu0
      %v625 = vadd.f32 %v497, %v624
      %v626 = vpop.f32.mrb[0].mxu0
      %627 = vmatprep.mubr.bf16.mxu0 0
      %628 = vmatmul.mubr.bf16.gmra.mrb[0].mxu0 %v474
      %v629 = vpop.f32.mrb[0].mxu0
      %v630 = vadd.f32 %v497, %v629
      %v631 = vpop.f32.mrb[0].mxu0
      %v632 = vpop.f32.mrb[0].mxu0
      %v633 = vadd.f32 %v497, %v632
      %v634 = vpop.f32.mrb[0].mxu0
      %635 = vmatprep.mubr.bf16.mxu0 0
      %636 = vmatmul.mubr.bf16.gmra.mrb[0].mxu0 %v475
      %v637 = vpop.f32.mrb[0].mxu0
      %v638 = vadd.f32 %v497, %v637
      %v639 = vpop.f32.mrb[0].mxu0
      %v640 = vpop.f32.mrb[0].mxu0
      %v641 = vadd.f32 %v497, %v640
      %v642 = vpop.f32.mrb[0].mxu0
      %643 = vdwg.mxu0
      %v644 = vmax.f32 %v582, 0.0
      %v645 = vmax.f32 %v585, 0.0
      %v646 = vmax.f32 %v590, 0.0
      %v647 = vmax.f32 %v593, 0.0
      %v648 = vmax.f32 %v598, 0.0
      %v649 = vmax.f32 %v601, 0.0
      %v650 = vmax.f32 %v606, 0.0
      %v651 = vmax.f32 %v609, 0.0
      %v652 = vmax.f32 %v614, 0.0
      %v653 = vmax.f32 %v617, 0.0
      %v654 = vmax.f32 %v622, 0.0
      %v655 = vmax.f32 %v625, 0.0
      %v656 = vmax.f32 %v630, 0.0
      %v657 = vmax.f32 %v633, 0.0
      %v658 = vmax.f32 %v638, 0.0
      %v659 = vmax.f32 %v641, 0.0
      %v660 = vpack.c.bf16 %v645, %v644
      %v661 = vpack.c.bf16 %v647, %v646
      %v662 = vpack.c.bf16 %v649, %v648
      %v663 = vpack.c.bf16 %v651, %v650
      %v664 = vpack.c.bf16 %v653, %v652
      %v665 = vpack.c.bf16 %v655, %v654
      %v666 = vpack.c.bf16 %v657, %v656
      %v667 = vpack.c.bf16 %v659, %v658
      %v668 = vld [vmem:[%s5] sm:$0xf]
      %v669 = vld [vmem:[%s5 + $0x4] sm:$0xf]
      %v670 = vld [vmem:[%s5 + $0x8] sm:$0xf]
      %v671 = vld [vmem:[%s5 + $0xc] sm:$0xf]
      %v672 = vld [vmem:[%s5 + $0x10] sm:$0xf]
      %v673 = vld [vmem:[%s5 + $0x14] sm:$0xf]
      %v674 = vld [vmem:[%s5 + $0x18] sm:$0xf]
      %v675 = vld [vmem:[%s5 + $0x1c] sm:$0xf]
      %v676 = vld [vmem:[%s5 + $0x20] sm:$0xf]
      %v677 = vld [vmem:[%s5 + $0x24] sm:$0xf]
      %v678 = vld [vmem:[%s5 + $0x28] sm:$0xf]
      %v679 = vld [vmem:[%s5 + $0x2c] sm:$0xf]
      %v680 = vld [vmem:[%s5 + $0x30] sm:$0xf]
      %v681 = vld [vmem:[%s5 + $0x34] sm:$0xf]
      %v682 = vld [vmem:[%s5 + $0x38] sm:$0xf]
      %v683 = vld [vmem:[%s5 + $0x3c] sm:$0xf]
      %v684 = vld [vmem:[%s6] sm:$0x1]
      %v686 = vlaneseq
      %v687 = vshrl.u32 %v686, 7
      %v688 = vsub.s32 0, %v687
      %v689 = vrot.slane %v684, %v688
      %v707 = vunpack.c.l.b16 %v668
      %v708 = vunpack.c.l.b16 %v669
      %v709 = vunpack.c.l.b16 %v670
      %v710 = vunpack.c.l.b16 %v671
      %v711 = vunpack.c.l.b16 %v672
      %v712 = vunpack.c.l.b16 %v673
      %v713 = vunpack.c.l.b16 %v674
      %v714 = vunpack.c.l.b16 %v675
      %v715 = vunpack.c.l.b16 %v676
      %v716 = vunpack.c.l.b16 %v677
      %v717 = vunpack.c.l.b16 %v678
      %v718 = vunpack.c.l.b16 %v679
      %v719 = vunpack.c.l.b16 %v680
      %v720 = vunpack.c.l.b16 %v681
      %v721 = vunpack.c.l.b16 %v682
      %v722 = vunpack.c.l.b16 %v683
      %v723 = vpack.c.b16 %v708, %v707
      %v724 = vpack.c.b16 %v710, %v709
      %v725 = vpack.c.b16 %v712, %v711
      %v726 = vpack.c.b16 %v714, %v713
      %v727 = vpack.c.b16 %v716, %v715
      %v728 = vpack.c.b16 %v718, %v717
      %v729 = vpack.c.b16 %v720, %v719
      %v730 = vpack.c.b16 %v722, %v721
      %739 = vmatprep.subr.bf16.mxu0 0
      %740 = vmatpush1.bf16.msra.mxu0 %v723
      %741 = vmatprep.subr.bf16.mxu0 0
      %742 = vmatpush1.bf16.msra.mxu0 %v724
      %743 = vmatprep.subr.bf16.mxu0 0
      %744 = vmatpush1.bf16.msra.mxu0 %v725
      %745 = vmatprep.subr.bf16.mxu0 0
      %746 = vmatpush1.bf16.msra.mxu0 %v726
      %747 = vmatprep.subr.bf16.mxu0 0
      %748 = vmatpush1.bf16.msra.mxu0 %v727
      %749 = vmatprep.subr.bf16.mxu0 0
      %750 = vmatpush1.bf16.msra.mxu0 %v728
      %751 = vmatprep.subr.bf16.mxu0 0
      %752 = vmatpush1.bf16.msra.mxu0 %v729
      %753 = vmatprep.subr.bf16.mxu0 0
      %754 = vmatpush1.bf16.msra.mxu0 %v730
      %755 = vmatprep.subr.bf16.mxu0 0
      %756 = vmatpush1.bf16.msra.mxu0 0
      %757 = vmatprep.subr.bf16.mxu0 0
      %758 = vmatpush1.bf16.msra.mxu0 0
      %759 = vmatprep.subr.bf16.mxu0 0
      %760 = vmatpush1.bf16.msra.mxu0 0
      %761 = vmatprep.subr.bf16.mxu0 0
      %762 = vmatpush1.bf16.msra.mxu0 0
      %763 = vmatprep.subr.bf16.mxu0 0
      %764 = vmatpush1.bf16.msra.mxu0 0
      %765 = vmatprep.subr.bf16.mxu0 0
      %766 = vmatpush1.bf16.msra.mxu0 0
      %767 = vmatprep.subr.bf16.mxu0 0
      %768 = vmatpush1.bf16.msra.mxu0 0
      %769 = vmatprep.subr.bf16.mxu0 0
      %770 = vmatpush1.bf16.msra.mxu0 0
      %771 = vmatprep.mubr.bf16.mxu0 0
      %772 = vmatmul.mubr.bf16.gmra.mrb[0].mxu0 %v660
      %v773 = vpop.f32.mrb[0].mxu0
      %v774 = vadd.f32 %v689, %v773
      %v775 = vpop.f32.mrb[0].mxu0
      %v776 = vpop.f32.mrb[0].mxu0
      %v777 = vadd.f32 %v689, %v776
      %v778 = vpop.f32.mrb[0].mxu0
      %779 = vmatprep.mubr.bf16.mxu0 0
      %780 = vmatmul.mubr.bf16.gmra.mrb[0].mxu0 %v661
      %v781 = vpop.f32.mrb[0].mxu0
      %v782 = vadd.f32 %v689, %v781
      %v783 = vpop.f32.mrb[0].mxu0
      %v784 = vpop.f32.mrb[0].mxu0
      %v785 = vadd.f32 %v689, %v784
      %v786 = vpop.f32.mrb[0].mxu0
      %787 = vmatprep.mubr.bf16.mxu0 0
      %788 = vmatmul.mubr.bf16.gmra.mrb[0].mxu0 %v662
      %v789 = vpop.f32.mrb[0].mxu0
      %v790 = vadd.f32 %v689, %v789
      %v791 = vpop.f32.mrb[0].mxu0
      %v792 = vpop.f32.mrb[0].mxu0
      %v793 = vadd.f32 %v689, %v792
      %v794 = vpop.f32.mrb[0].mxu0
      %795 = vmatprep.mubr.bf16.mxu0 0
      %796 = vmatmul.mubr.bf16.gmra.mrb[0].mxu0 %v663
      %v797 = vpop.f32.mrb[0].mxu0
      %v798 = vadd.f32 %v689, %v797
      %v799 = vpop.f32.mrb[0].mxu0
      %v800 = vpop.f32.mrb[0].mxu0
      %v801 = vadd.f32 %v689, %v800
      %v802 = vpop.f32.mrb[0].mxu0
      %803 = vmatprep.mubr.bf16.mxu0 0
      %804 = vmatmul.mubr.bf16.gmra.mrb[0].mxu0 %v664
      %v805 = vpop.f32.mrb[0].mxu0
      %v806 = vadd.f32 %v689, %v805
      %v807 = vpop.f32.mrb[0].mxu0
      %v808 = vpop.f32.mrb[0].mxu0
      %v809 = vadd.f32 %v689, %v808
      %v810 = vpop.f32.mrb[0].mxu0
      %811 = vmatprep.mubr.bf16.mxu0 0
      %812 = vmatmul.mubr.bf16.gmra.mrb[0].mxu0 %v665
      %v813 = vpop.f32.mrb[0].mxu0
      %v814 = vadd.f32 %v689, %v813
      %v815 = vpop.f32.mrb[0].mxu0
      %v816 = vpop.f32.mrb[0].mxu0
      %v817 = vadd.f32 %v689, %v816
      %v818 = vpop.f32.mrb[0].mxu0
      %819 = vmatprep.mubr.bf16.mxu0 0
      %820 = vmatmul.mubr.bf16.gmra.mrb[0].mxu0 %v666
      %v821 = vpop.f32.mrb[0].mxu0
      %v822 = vadd.f32 %v689, %v821
      %v823 = vpop.f32.mrb[0].mxu0
      %v824 = vpop.f32.mrb[0].mxu0
      %v825 = vadd.f32 %v689, %v824
      %v826 = vpop.f32.mrb[0].mxu0
      %827 = vmatprep.mubr.bf16.mxu0 0
      %828 = vmatmul.mubr.bf16.gmra.mrb[0].mxu0 %v667
      %v829 = vpop.f32.mrb[0].mxu0
      %v830 = vadd.f32 %v689, %v829
      %v831 = vpop.f32.mrb[0].mxu0
      %v832 = vpop.f32.mrb[0].mxu0
      %v833 = vadd.f32 %v689, %v832
      %v834 = vpop.f32.mrb[0].mxu0
      %835 = vdwg.mxu0
      %v836 = vpack.c.bf16 %v777, %v774
      %v837 = vpack.c.bf16 %v785, %v782
      %v838 = vpack.c.bf16 %v793, %v790
      %v839 = vpack.c.bf16 %v801, %v798
      %v840 = vpack.c.bf16 %v809, %v806
      %v841 = vpack.c.bf16 %v817, %v814
      %v842 = vpack.c.bf16 %v825, %v822
      %v843 = vpack.c.bf16 %v833, %v830
      %v852 = vunpack.c.l.b16 %v836
      %v853 = vunpack.c.h.b16 %v836
      %v854 = vunpack.c.l.b16 %v837
      %v855 = vunpack.c.h.b16 %v837
      %v856 = vunpack.c.l.b16 %v838
      %v857 = vunpack.c.h.b16 %v838
      %v858 = vunpack.c.l.b16 %v839
      %v859 = vunpack.c.h.b16 %v839
      %v860 = vunpack.c.l.b16 %v840
      %v861 = vunpack.c.h.b16 %v840
      %v862 = vunpack.c.l.b16 %v841
      %v863 = vunpack.c.h.b16 %v841
      %v864 = vunpack.c.l.b16 %v842
      %v865 = vunpack.c.h.b16 %v842
      %v866 = vunpack.c.l.b16 %v843
      %v867 = vunpack.c.h.b16 %v843
      %v868 = vpack.c.b16 %v852, %v852
      %v869 = vpack.c.b16 %v853, %v853
      %v870 = vpack.c.b16 %v854, %v854
      %v871 = vpack.c.b16 %v855, %v855
      %v872 = vpack.c.b16 %v856, %v856
      %v873 = vpack.c.b16 %v857, %v857
      %v874 = vpack.c.b16 %v858, %v858
      %v875 = vpack.c.b16 %v859, %v859
      %v876 = vpack.c.b16 %v860, %v860
      %v877 = vpack.c.b16 %v861, %v861
      %v878 = vpack.c.b16 %v862, %v862
      %v879 = vpack.c.b16 %v863, %v863
      %v880 = vpack.c.b16 %v864, %v864
      %v881 = vpack.c.b16 %v865, %v865
      %v882 = vpack.c.b16 %v866, %v866
      %v883 = vpack.c.b16 %v867, %v867
      %900 = vst [vmem:[%s280] sm:$0xf] %v868
      %901 = vst [vmem:[%s280 + $0x4] sm:$0xf] %v869
      %902 = vst [vmem:[%s280 + $0x8] sm:$0xf] %v870
      %903 = vst [vmem:[%s280 + $0xc] sm:$0xf] %v871
      %904 = vst [vmem:[%s280 + $0x10] sm:$0xf] %v872
      %905 = vst [vmem:[%s280 + $0x14] sm:$0xf] %v873
      %906 = vst [vmem:[%s280 + $0x18] sm:$0xf] %v874
      %907 = vst [vmem:[%s280 + $0x1c] sm:$0xf] %v875
      %908 = vst [vmem:[%s280 + $0x20] sm:$0xf] %v876
      %909 = vst [vmem:[%s280 + $0x24] sm:$0xf] %v877
      %910 = vst [vmem:[%s280 + $0x28] sm:$0xf] %v878
      %911 = vst [vmem:[%s280 + $0x2c] sm:$0xf] %v879
      %912 = vst [vmem:[%s280 + $0x30] sm:$0xf] %v880
      %913 = vst [vmem:[%s280 + $0x34] sm:$0xf] %v881
      %914 = vst [vmem:[%s280 + $0x38] sm:$0xf] %v882
      %915 = vst [vmem:[%s280 + $0x3c] sm:$0xf] %v883
      %s916 = smul.u32 16, %s18
      %p917 = scmp.lt.s32.totalorder %s916, 31
      %s918 = scalar_select %p917, %s916, 31
      %s919 = smul.addr %s918, 4
      %s920 = scalar_lea.vmem %s7, %s919
      // Predicated region
      $region49: #{fnn_forward.1} parent=47 // pred_check
        %p921 = pneg %p188
      $region50: #{fnn_forward.1} parent=47 // pred_check_branch
        %923 = sbr.rel (%p921) target = $region52
      $region51: #{fnn_forward.1} parent=47 // pred_region
        %s924 = smul.u32 16, %s18
      $region52: #{fnn_forward.1} parent=47 // pred_fallthru
        _
    $region48: #{fnn_forward.1} parent=5 // pred_fallthru
      _
    %p925 = scmp.le.s32.totalorder 2, %s13
    // Predicated region
    $region53: #{fnn_forward.1} parent=5 // pred_check
      %p926 = pneg %p925
    $region54: #{fnn_forward.1} parent=5 // pred_check_branch
      %928 = sbr.rel (%p926) target = $region56
    $region55: #{fnn_forward.1} parent=5 // pred_region
      %s929 = ssub.s32 %s13, 2
      // Predicated region
      $region57: #{fnn_forward.1} parent=55 // pred_check
        %p930 = pneg %p194
      $region58: #{fnn_forward.1} parent=55 // pred_check_branch
        %932 = sbr.rel (%p930) target = $region60
      $region59: #{fnn_forward.1} parent=55 // pred_region
        %s933 = smul.u32 16, %s19
        %p934 = scmp.lt.s32.totalorder %s933, 31
        %s935 = scalar_select %p934, %s933, 31
        %s936 = smul.addr %s935, 4
        %s937 = scalar_lea.vmem %s7, %s936
      $region60: #{fnn_forward.1} parent=55 // pred_fallthru
        _
    $region56: #{fnn_forward.1} parent=5 // pred_fallthru
      _
  $region6: #{fnn_forward.1} parent=0 // loop_footer
    %s17 = sadd.s32 1, %s13
  $region7: #{fnn_forward.1} parent=0 // loop_footer_branch
    %12 = sbr.rel target = $region3
  $region8: #{fnn_forward.1} parent=0 // loop_exit
    _

</llo_original>
